<compile_context>
chip_gen: v6e
topology: v6e:2x2x1
jax: 0.10.0
libtpu: 0.0.40
codegen_flags: <defaults>
</compile_context>

<pallas_src>
import functools

import jax
import jax.numpy as jnp
from jax.experimental import pallas as pl
from jax.experimental.pallas import tpu as pltpu


def _round_up(a: int, b: int) -> int:
    return ((a + b - 1) // b) * b


def _proj_matmul_kernel(x_ref, w_ref, o_ref, *, compute_dtype):
    """o = x @ w for one row tile. W block is the whole (padded) matrix."""
    x = x_ref[...]
    if compute_dtype is not None and x.dtype != jnp.dtype(compute_dtype):
        # In-VMEM cast (VPU) right before the MXU -- avoids a separate HBM pass.
        x = x.astype(compute_dtype)
    o_ref[...] = jnp.dot(
        x, w_ref[...], preferred_element_type=jnp.float32
    ).astype(o_ref.dtype)


def prepare_proj(proj, *, compute_dtype=None):
    """One-time weight prep: cast + pad last dim to a multiple of 128.

    Hoist this out of the per-forward path (call once at init) and pass the
    result via `proj=prepared, prepared_d_out=d_out`.
    Returns (prepared_proj, true_d_out).
    """
    _, d_out = proj.shape
    if compute_dtype is not None:
        proj = proj.astype(compute_dtype)
    d_out_p = _round_up(d_out, 128)
    if d_out_p != d_out:
        proj = jnp.pad(proj, ((0, 0), (0, d_out_p - d_out)))
    return proj, d_out


def proj_learner_forward(x, proj, *, tm: int = 1024, compute_dtype=None,
                         out_dtype=None, min_pallas_rows: int = 1024,
                         prepared_d_out=None):
    """ProjLearner.forward: x @ proj (identity if proj is None).

    x    : [..., D_in]
    proj : [D_in, D_out]   (or a prepare_proj() result with prepared_d_out set)
    returns [..., D_out] in out_dtype (default: x.dtype)
    """
    if proj is None:
        return x

    orig_shape = x.shape
    d_in = orig_shape[-1]
    out_dtype = jnp.dtype(out_dtype) if out_dtype is not None else x.dtype

    if prepared_d_out is None:
        proj_p, d_out = prepare_proj(proj, compute_dtype=compute_dtype)
    else:
        proj_p, d_out = proj, prepared_d_out
    d_in2, d_out_p = proj_p.shape
    assert d_in == d_in2, "inner dims must match"

    # Flatten all leading dims onto the row axis.
    x2 = x.reshape(-1, d_in)
    n = x2.shape[0]

    # Small-N fast path: one fused XLA dot beats pallas_call fixed overhead.
    if n < min_pallas_rows:
        xm = x2.astype(compute_dtype) if compute_dtype is not None else x2
        out = jnp.dot(xm, proj_p, preferred_element_type=jnp.float32)
        out = out.astype(out_dtype)[:, :d_out]
        return out.reshape(orig_shape[:-1] + (d_out,))

    # Sublane granularity of the x tile as it sits in VMEM (x keeps HBM dtype).
    sub = 16 if x2.dtype == jnp.bfloat16 else 8

    # Row tile: as large as requested, clamped to the (rounded-up) row count.
    tm_eff = max(sub, min(_round_up(tm, sub), _round_up(n, sub)))
    # Ensure >=2 grid steps so both TensorCores get work on v7x (cheap on 1-TC
    # chips: one extra ~0.35us grid step).
    if pl.cdiv(n, tm_eff) < 2 and n > sub:
        tm_eff = max(sub, _round_up(pl.cdiv(n, 2), sub))

    grid = (pl.cdiv(n, tm_eff),)

    # VMEM budget from actual buffer sizes (+25% headroom), capped v7x-safe.
    x_buf = 2 * tm_eff * d_in * x2.dtype.itemsize                 # double-buffered stream
    w_buf = d_in * d_out_p * proj_p.dtype.itemsize                # single-buffered resident
    o_buf = 2 * tm_eff * d_out_p * jnp.dtype(out_dtype).itemsize  # double-buffered stream
    vmem_limit = min(int(1.25 * (x_buf + w_buf + o_buf)) + (2 << 20), 64 << 20)

    cost = pl.CostEstimate(
        flops=2 * n * d_in * d_out_p,
        transcendentals=0,
        bytes_accessed=(n * d_in * x2.dtype.itemsize
                        + d_in * d_out_p * proj_p.dtype.itemsize
                        + n * d_out_p * jnp.dtype(out_dtype).itemsize),
    )

    out = pl.pallas_call(
        functools.partial(_proj_matmul_kernel, compute_dtype=compute_dtype),
        out_shape=jax.ShapeDtypeStruct((n, d_out_p), out_dtype),
        grid_spec=pltpu.PrefetchScalarGridSpec(
            num_scalar_prefetch=0,
            grid=grid,
            in_specs=[
                # Row tile of x, streamed over the grid (ragged last block is
                # masked by Pallas; garbage rows only feed discarded outputs).
                pl.BlockSpec((tm_eff, d_in), lambda i: (i, 0)),
                # Whole projection matrix, constant index -> VMEM-resident,
                # single-buffered (it never changes across the grid).
                pl.BlockSpec((d_in, d_out_p), lambda i: (0, 0),
                             pipeline_mode=pl.Buffered(1)),
            ],
            out_specs=pl.BlockSpec((tm_eff, d_out_p), lambda i: (i, 0)),
        ),
        compiler_params=pltpu.CompilerParams(
            dimension_semantics=("parallel",),
            vmem_limit_bytes=vmem_limit,
        ),
        cost_estimate=cost,
    )(x2, proj_p)

    # Strip lane padding (no row slice needed: rows were never padded).
    if d_out_p != d_out:
        out = out[:, :d_out]
    return out.reshape(orig_shape[:-1] + (d_out,))


if __name__ == "__main__":
    key = jax.random.PRNGKey(0)
    kx, kp, kx2, kp2 = jax.random.split(key, 4)

    # ---- Test 1: small shape, f32, force the Pallas path (ragged rows,
    #      2-step grid, lane padding 32 -> 128). ----
    B, T, D_in, D_out = 2, 5, 64, 32
    x = jax.random.normal(kx, (B, T, D_in), dtype=jnp.float32)
    # CLIP initializes visual.proj as (width ** -0.5) * randn(width, output_dim).
    proj = (D_in ** -0.5) * jax.random.normal(kp, (D_in, D_out), dtype=jnp.float32)
    ref = x @ proj

    out = proj_learner_forward(x, proj, min_pallas_rows=0)
    out = jax.block_until_ready(out)
    assert out.shape == (B, T, D_out)
    assert jnp.allclose(out, ref, atol=1e-5, rtol=1e-5), "f32 Pallas mismatch"

    # ---- Test 2: same inputs through the small-N XLA fast path (default). ----
    out_fast = jax.block_until_ready(proj_learner_forward(x, proj))
    assert jnp.allclose(out_fast, ref, atol=1e-5, rtol=1e-5), "fast-path mismatch"

    # ---- Test 3: bf16 compute + bf16 output on a slightly larger (still
    #      small) shape; weight prepared once out of the call path. ----
    B2, T2, D_in2, D_out2 = 3, 100, 128, 256
    x2 = jax.random.normal(kx2, (B2, T2, D_in2), dtype=jnp.float32)
    proj2 = (D_in2 ** -0.5) * jax.random.normal(kp2, (D_in2, D_out2), dtype=jnp.float32)
    ref2 = x2 @ proj2

    proj2_prep, d_out2 = prepare_proj(proj2, compute_dtype=jnp.bfloat16)
    out2 = proj_learner_forward(
        x2, proj2_prep, prepared_d_out=d_out2,
        compute_dtype=jnp.bfloat16, out_dtype=jnp.bfloat16, min_pallas_rows=0)
    out2 = jax.block_until_ready(out2)
    assert out2.shape == (B2, T2, D_out2)
    assert out2.dtype == jnp.bfloat16
    assert jnp.allclose(out2.astype(jnp.float32), ref2, atol=1e-1, rtol=1e-1), \
        "bf16 mismatch vs reference"

    # ---- Test 4: proj is None -> identity (matches the PyTorch module). ----
    assert jnp.array_equal(proj_learner_forward(x, None), x)

    print("KERNEL_OK")
</pallas_src>

<mosaic_0001>
module attributes {stable_mosaic.version = 11 : i64} {
  func.func @_proj_matmul_kernel(%arg0: i32, %arg1: memref<8x64xf32, #tpu.memory_space<vmem>>, %arg2: memref<64x128xf32, #tpu.memory_space<vmem>>, %arg3: memref<8x128xf32, #tpu.memory_space<vmem>>) attributes {dimension_semantics = [#tpu.dimension_semantics<parallel>], iteration_bounds = array<i64: 2>, scalar_prefetch = 0 : i64, scratch_operands = 0 : i64, tpu.core_type = #tpu.core_type<tc>, window_params = [{transform_indices = @transform_0, window_bounds = array<i64: 8, 64>}, {pipeline_mode = #tpu.pipeline_mode<synchronous>, transform_indices = @transform_1, window_bounds = array<i64: 64, 128>}, {transform_indices = @transform_2, window_bounds = array<i64: 8, 128>}]} {
    %c0 = arith.constant 0 : index
    %c0_0 = arith.constant 0 : index
    %0 = vector.load %arg1[%c0, %c0_0] : memref<8x64xf32, #tpu.memory_space<vmem>>, vector<8x64xf32>
    %c0_1 = arith.constant 0 : index
    %c0_2 = arith.constant 0 : index
    %1 = vector.load %arg2[%c0_1, %c0_2] : memref<64x128xf32, #tpu.memory_space<vmem>>, vector<64x128xf32>
    %cst = arith.constant dense<0.000000e+00> : vector<8x128xf32>
    %2 = tpu.matmul %0, %1, %cst {dimension_numbers = #tpu.dot_dimension_numbers<[1], [0], [0], [1], [0, 0, 1, 1], [], []>} : vector<8x64xf32>, vector<64x128xf32>, vector<8x128xf32> -> vector<8x128xf32>
    %c0_3 = arith.constant 0 : index
    %c0_4 = arith.constant 0 : index
    %3 = vector.load %arg3[%c0_3, %c0_4] : memref<8x128xf32, #tpu.memory_space<vmem>>, vector<8x128xf32>
    tpu.vector_store %arg3[%c0_3, %c0_4], %2 {strides = array<i32>} : memref<8x128xf32, #tpu.memory_space<vmem>>, vector<8x128xf32>,
    return
  }
  func.func @transform_0(%arg0: i32) -> (i32, i32) {
    %c0_i32 = arith.constant 0 : i32
    %c0_i32_0 = arith.constant 0 : i32
    return %arg0, %c0_i32 : i32, i32
  }
  func.func @transform_1(%arg0: i32) -> (i32, i32) {
    %c0_i32 = arith.constant 0 : i32
    %c0_i32_0 = arith.constant 0 : i32
    %c0_i32_1 = arith.constant 0 : i32
    return %c0_i32, %c0_i32_0 : i32, i32
  }
  func.func @transform_2(%arg0: i32) -> (i32, i32) {
    %c0_i32 = arith.constant 0 : i32
    %c0_i32_0 = arith.constant 0 : i32
    return %arg0, %c0_i32 : i32, i32
  }
}

</mosaic_0001>

<llo_original>
// kernel: tpu_custom_call.1
$region0: #{tpu_custom_call.1}
  #allocation0 [shape = 'u32[]', space=smem, size = 0x4, offset = 0x4, fixed_abs, tag = 'smem constant byte address 0x4 - core index']
  #allocation1 [shape = 'u32[144,128]{1,0:T(1,128)}', space=vmem, size = 0x12000, scoped, tag = 'internal scratch']
  %s0 = inlined_call_operand.hbm [shape: f32[10,64], index: 0, kind: input, shape index: {}]
  %s1 = inlined_call_operand.hbm [shape: f32[64,128], index: 1, kind: input, shape index: {}]
  %s2 = inlined_call_operand.hbm [shape: f32[10,128], index: 2, kind: output, shape index: {}]
  %s3 = sld [smem:[#allocation0]]
  $region49: #{tpu_custom_call.1} parent=0
    _
  %s5 = ssub.s32 1, %s3
  %s6 = scalar_select 0, %s5, %s3
  $region1: #{tpu_custom_call.1} parent=0
    #allocation2 [shape = 'u8[8192]{0}', space=vmem, size = 0x2000, scoped, tag = 'input window, operand 0']
    #allocation3 [shape = 's32[2]{0}', space=sflag, size = 0x8, scoped, tag = 'scoped memory for tpu_custom_call.1']
    #allocation4 [shape = 's32[2]{0}', space=sflag, size = 0x8, scoped, tag = 'scoped memory for tpu_custom_call.1']
    #allocation5 [shape = 'u8[32768]{0}', space=vmem, size = 0x8000, scoped, tag = 'input window, operand 1, single buffered']
    #allocation6 [shape = 's32[1]{0}', space=sflag, size = 0x4, scoped, tag = 'scoped memory for tpu_custom_call.1']
    #allocation7 [shape = 'u8[8192]{0}', space=vmem, size = 0x2000, scoped, tag = 'output window, operand 0']
    %7 = vsyncpa [#allocation3], 0
    %s8 = scalar_lea.sflag [#allocation3], 1
    %9 = vsyncpa %s8, 0
    %10 = vsyncpa [#allocation6], 0
    %11 = vsyncpa [#allocation4], 0
    %s12 = scalar_lea.sflag [#allocation4], 1
    %13 = vsyncpa %s12, 0
    loop: start=0, step=1, limit=4
    $region2: #{tpu_custom_call.1} parent=1 // loop_pre_header
      _
    $region3: #{tpu_custom_call.1} parent=1 // loop_header
      %s15 = sphi 0, %s19
      %p16 = scmp.ge.s32.totalorder %s15, 4
      %s25 = sphi 0, %s27
      %s28 = sphi 0, %s25
      %s29 = sphi 0, %s28
      %s45 = sphi 0, %s29
      %s49 = sphi 0, %s49
      %s51 = sphi 0, %s49
      %s52 = sphi 0, %s51
      %s66 = sphi 0, %s52
      %s72 = sphi 0, %s74
      %s75 = sphi 0, %s72
      %s76 = sphi 0, %s75
      %s92 = sphi 0, %s76
    $region4: #{tpu_custom_call.1} parent=1 // loop_header_branch
      %18 = sbr.rel (%p16) target = $region8
    $region5: #{tpu_custom_call.1} parent=1 // loop_body
      %s20 = ssub.s32 %s15, 1
      %s21 = ssub.s32 %s15, 2
      %s22 = sadd.s32 %s15, 1
      %s23 = ssub.s32 %s15, %s22
      %p24 = scmp.eq.s32.totalorder %s23, 0
      %s26 = sadd.s32 %s25, 1
      %s27 = scalar_select %p24, %s25, %s26
      %p30 = pneg %p24
      %p31 = scmp.eq.s32.totalorder %s15, 1
      %p32 = por %p30, %p31
      %p33 = scmp.ne.s32.totalorder %s25, %s28
      %p34 = scmp.eq.s32.totalorder %s15, 0
      %p35 = por %p33, %p34
      %p36 = scmp.ne.s32.totalorder %s25, %s28
      %p37 = scmp.eq.s32.totalorder %s20, 1
      %p38 = por %p36, %p37
      %p39 = scmp.ne.s32.totalorder %s28, %s29
      %p40 = scmp.eq.s32.totalorder %s20, 0
      %p41 = por %p39, %p40
      %p42 = scmp.ne.s32.totalorder %s28, %s29
      %p43 = scmp.eq.s32.totalorder %s21, 1
      %p44 = por %p42, %p43
      %p46 = scmp.ne.s32.totalorder %s29, %s45
      %p47 = scmp.eq.s32.totalorder %s21, 0
      %p48 = por %p46, %p47
      %s50 = sadd.s32 %s49, 1
      %p53 = scmp.eq.s32.totalorder %s15, 1
      %p54 = scmp.ne.s32.totalorder %s49, %s51
      %p55 = scmp.eq.s32.totalorder %s15, 0
      %p56 = por %p54, %p55
      %p57 = scmp.ne.s32.totalorder %s49, %s51
      %p58 = scmp.eq.s32.totalorder %s20, 1
      %p59 = por %p57, %p58
      %p60 = scmp.ne.s32.totalorder %s51, %s52
      %p61 = scmp.eq.s32.totalorder %s20, 0
      %p62 = por %p60, %p61
      %p63 = scmp.ne.s32.totalorder %s51, %s52
      %p64 = scmp.eq.s32.totalorder %s21, 1
      %p65 = por %p63, %p64
      %p67 = scmp.ne.s32.totalorder %s52, %s66
      %p68 = scmp.eq.s32.totalorder %s21, 0
      %p69 = por %p67, %p68
      %s70 = ssub.s32 %s15, %s22
      %p71 = scmp.eq.s32.totalorder %s70, 0
      %s73 = sadd.s32 %s72, 1
      %s74 = scalar_select %p71, %s72, %s73
      %p77 = pneg %p71
      %p78 = scmp.eq.s32.totalorder %s15, 1
      %p79 = por %p77, %p78
      %p80 = scmp.ne.s32.totalorder %s72, %s75
      %p81 = scmp.eq.s32.totalorder %s15, 0
      %p82 = por %p80, %p81
      %p83 = scmp.ne.s32.totalorder %s72, %s75
      %p84 = scmp.eq.s32.totalorder %s20, 1
      %p85 = por %p83, %p84
      %p86 = scmp.ne.s32.totalorder %s75, %s76
      %p87 = scmp.eq.s32.totalorder %s20, 0
      %p88 = por %p86, %p87
      %p89 = scmp.ne.s32.totalorder %s75, %s76
      %p90 = scmp.eq.s32.totalorder %s21, 1
      %p91 = por %p89, %p90
      %p93 = scmp.ne.s32.totalorder %s76, %s92
      %p94 = scmp.eq.s32.totalorder %s21, 0
      %p95 = por %p93, %p94
      %p96 = scmp.le.s32.totalorder 1, %s15
      %p97 = scmp.lt.s32.totalorder %s15, 3
      %p98 = pnand %p96, %p97
      %p99 = pneg %p98
      // Predicated region
      $region9: #{tpu_custom_call.1} parent=5 // pred_check
        _
      $region10: #{tpu_custom_call.1} parent=5 // pred_check_branch
        %101 = sbr.rel (%p98) target = $region12
      $region11: #{tpu_custom_call.1} parent=5 // pred_region
        %s102 = ssub.s32 %s15, 1
        // Predicated region
        $region13: #{tpu_custom_call.1} parent=11 // pred_check
          %p103 = pneg %p62
        $region14: #{tpu_custom_call.1} parent=11 // pred_check_branch
          %105 = sbr.rel (%p103) target = $region16
        $region15: #{tpu_custom_call.1} parent=11 // pred_region
          %s107 = ssub.s32 1024, 1024
          %108 = vsyncadd [#allocation6], %s107
          %s109 = sshll.u32 [#allocation5], 4
          %s110 = int_to_ptr.vmem [resolvable:$true] %s109
          %115 = dma.hbm_to_vmem [thread:$0]  %s1, 1024, %s110, [#allocation6], 128, 128, 8
        $region16: #{tpu_custom_call.1} parent=11 // pred_fallthru
          _
      $region12: #{tpu_custom_call.1} parent=5 // pred_fallthru
        _
      %p116 = scmp.lt.s32.totalorder %s15, 2
      // Predicated region
      $region17: #{tpu_custom_call.1} parent=5 // pred_check
        %p117 = pneg %p116
      $region18: #{tpu_custom_call.1} parent=5 // pred_check_branch
        %119 = sbr.rel (%p117) target = $region20
      $region19: #{tpu_custom_call.1} parent=5 // pred_region
        // Predicated region
        $region21: #{tpu_custom_call.1} parent=19 // pred_check
          %p120 = pneg %p35
        $region22: #{tpu_custom_call.1} parent=19 // pred_check_branch
          %122 = sbr.rel (%p120) target = $region24
        $region23: #{tpu_custom_call.1} parent=19 // pred_region
          %s123 = sand.u32 %s25, 1
          %s124 = scalar_lea.sflag [#allocation3], %s123
          %s125 = sand.u32 %s25, 1
          %s126 = smul.addr %s125, 8
          %s127 = scalar_lea.vmem [#allocation2], %s126
          %s129 = ssub.s32 128, 128
          %130 = vsyncadd %s124, %s129
          %s131 = smul.addr %s15, 128
          %s132 = scalar_lea.hbm %s0, %s131
          %s134 = sshll.u32 %s127, 4
          %s135 = int_to_ptr.vmem [resolvable:$true] %s134
          %137 = dma.hbm_to_vmem [thread:$0]  %s132, 128, %s135, %s124
        $region24: #{tpu_custom_call.1} parent=19 // pred_fallthru
          _
      $region20: #{tpu_custom_call.1} parent=5 // pred_fallthru
        _
      %p138 = scmp.le.s32.totalorder 1, %s15
      %p139 = scmp.lt.s32.totalorder %s15, 3
      %p140 = pnand %p138, %p139
      %p141 = pneg %p140
      // Predicated region
      $region25: #{tpu_custom_call.1} parent=5 // pred_check
        _
      $region26: #{tpu_custom_call.1} parent=5 // pred_check_branch
        %143 = sbr.rel (%p140) target = $region28
      $region27: #{tpu_custom_call.1} parent=5 // pred_region
        %s144 = ssub.s32 %s15, 1
        %s145 = sand.u32 %s28, 1
        %s146 = scalar_lea.sflag [#allocation3], %s145
        %s147 = sand.u32 %s28, 1
        %s148 = smul.addr %s147, 8
        %s149 = scalar_lea.vmem [#allocation2], %s148
        // Predicated region
        $region29: #{tpu_custom_call.1} parent=27 // pred_check
          %p150 = pneg %p41
        $region30: #{tpu_custom_call.1} parent=27 // pred_check_branch
          %152 = sbr.rel (%p150) target = $region32
        $region31: #{tpu_custom_call.1} parent=27 // pred_region
          %153 = dma.done %s146, 128
        $region32: #{tpu_custom_call.1} parent=27 // pred_fallthru
          _
        // Predicated region
        $region33: #{tpu_custom_call.1} parent=27 // pred_check
          %p154 = pneg %p62
        $region34: #{tpu_custom_call.1} parent=27 // pred_check_branch
          %156 = sbr.rel (%p154) target = $region36
        $region35: #{tpu_custom_call.1} parent=27 // pred_region
          %157 = dma.done [#allocation6], 1024
        $region36: #{tpu_custom_call.1} parent=27 // pred_fallthru
          _
        %s158 = sand.u32 %s28, 1
        %s159 = scalar_lea.sflag [#allocation3], %s158
        %s160 = sand.u32 %s28, 1
        %s161 = smul.addr %s160, 8
        %s162 = scalar_lea.vmem [#allocation2], %s161
        %p163 = pneg %p41
        %p164 = pneg %p38
        %p165 = pneg %p62
        %p166 = pneg %p59
        %p167 = pneg %p88
        %p168 = pneg %p85
        %s169 = sand.u32 %s75, 1
        %s170 = scalar_lea.sflag [#allocation4], %s169
        %s171 = sand.u32 %s75, 1
        %s172 = smul.addr %s171, 8
        %s173 = scalar_lea.vmem [#allocation7], %s172
        %v174 = vld [vmem:[%s149] sm:$0xff]
        %v175 = vld [vmem:[#allocation5] sm:$0xff]
        %v176 = vld [vmem:[#allocation5 + $0x8] sm:$0xff]
        %v177 = vld [vmem:[#allocation5 + $0x10] sm:$0xff]
        %v178 = vld [vmem:[#allocation5 + $0x18] sm:$0xff]
        %v179 = vld [vmem:[#allocation5 + $0x20] sm:$0xff]
        %v180 = vld [vmem:[#allocation5 + $0x28] sm:$0xff]
        %v181 = vld [vmem:[#allocation5 + $0x30] sm:$0xff]
        %v182 = vld [vmem:[#allocation5 + $0x38] sm:$0xff]
        %vm183 = vcmask 523264
        %v185 = vsel %vm183, %v174, 0
        %187 = vmatprep.subr.mxu0 0.0
        %188 = vmatpush1.msra.mxu0 0.0
        %189 = vmatprep.subr.mxu0 0.0
        %190 = vmatpush1.msra.mxu0 0.0
        %191 = vmatprep.subr.mxu0 0.0
        %192 = vmatpush1.msra.mxu0 0.0
        %193 = vmatprep.subr.mxu0 0.0
        %194 = vmatpush1.msra.mxu0 0.0
        %195 = vmatprep.subr.mxu0 0.0
        %196 = vmatpush1.msra.mxu0 0.0
        %197 = vmatprep.subr.mxu0 0.0
        %198 = vmatpush1.msra.mxu0 0.0
        %199 = vmatprep.subr.mxu0 0.0
        %200 = vmatpush1.msra.mxu0 0.0
        %201 = vmatprep.subr.mxu0 0.0
        %202 = vmatpush1.msra.mxu0 0.0
        %203 = vmatprep.subr.mxu0 0.0
        %204 = vmatpush1.msra.mxu0 %v182
        %205 = vmatprep.subr.mxu0 0.0
        %206 = vmatpush1.msra.mxu0 %v181
        %207 = vmatprep.subr.mxu0 0.0
        %208 = vmatpush1.msra.mxu0 %v180
        %209 = vmatprep.subr.mxu0 0.0
        %210 = vmatpush1.msra.mxu0 %v179
        %211 = vmatprep.subr.mxu0 0.0
        %212 = vmatpush1.msra.mxu0 %v178
        %213 = vmatprep.subr.mxu0 0.0
        %214 = vmatpush1.msra.mxu0 %v177
        %215 = vmatprep.subr.mxu0 0.0
        %216 = vmatpush1.msra.mxu0 %v176
        %217 = vmatprep.subr.mxu0 0.0
        %218 = vmatpush1.msra.mxu0 %v175
        %219 = vmatprep.subr.mxu0 0.0
        %220 = vmatpush2.msra.mxu0 0.0
        %221 = vmatprep.subr.mxu0 0.0
        %222 = vmatpush2.msra.mxu0 0.0
        %223 = vmatprep.subr.mxu0 0.0
        %224 = vmatpush2.msra.mxu0 0.0
        %225 = vmatprep.subr.mxu0 0.0
        %226 = vmatpush2.msra.mxu0 0.0
        %227 = vmatprep.subr.mxu0 0.0
        %228 = vmatpush2.msra.mxu0 0.0
        %229 = vmatprep.subr.mxu0 0.0
        %230 = vmatpush2.msra.mxu0 0.0
        %231 = vmatprep.subr.mxu0 0.0
        %232 = vmatpush2.msra.mxu0 0.0
        %233 = vmatprep.subr.mxu0 0.0
        %234 = vmatpush2.msra.mxu0 0.0
        %235 = vmatprep.subr.mxu0 0.0
        %236 = vmatpush2.msra.mxu0 0.0
        %237 = vmatprep.subr.mxu0 0.0
        %238 = vmatpush2.msra.mxu0 0.0
        %239 = vmatprep.subr.mxu0 0.0
        %240 = vmatpush2.msra.mxu0 0.0
        %241 = vmatprep.subr.mxu0 0.0
        %242 = vmatpush2.msra.mxu0 0.0
        %243 = vmatprep.subr.mxu0 0.0
        %244 = vmatpush2.msra.mxu0 0.0
        %245 = vmatprep.subr.mxu0 0.0
        %246 = vmatpush2.msra.mxu0 0.0
        %247 = vmatprep.subr.mxu0 0.0
        %248 = vmatpush2.msra.mxu0 0.0
        %249 = vmatprep.subr.mxu0 0.0
        %250 = vmatpush2.msra.mxu0 0.0
        %251 = vmatprep.mubr.f32.mxu0 0.0
        %252 = vmatmul.mubr.f32.gmra.mxu0 %v185
        %v253 = vpop.f32.mrf.mxu0
        %v254 = vadd.f32 0.0, %v253
        %v255 = vpop.f32.mrf.mxu0
        %256 = vdwg.mxu0
        %257 = vst [vmem:[%s173] sm:$0xff] %v254
        %s258 = sand.u32 %s75, 1
        %s259 = scalar_lea.sflag [#allocation4], %s258
        %s260 = sand.u32 %s75, 1
        %s261 = smul.addr %s260, 8
        %s262 = scalar_lea.vmem [#allocation7], %s261
        // Predicated region
        $region37: #{tpu_custom_call.1} parent=27 // pred_check
          %p263 = pneg %p85
        $region38: #{tpu_custom_call.1} parent=27 // pred_check_branch
          %265 = sbr.rel (%p263) target = $region40
        $region39: #{tpu_custom_call.1} parent=27 // pred_region
          %s267 = ssub.s32 128, 128
          %268 = vsyncadd %s259, %s267
          %s269 = smul.addr %s20, 128
          %s270 = scalar_lea.hbm %s2, %s269
          %s272 = sshll.u32 %s262, 4
          %s273 = int_to_ptr.vmem [resolvable:$true] %s272
          %275 = dma.vmem_to_hbm [thread:$0]  %s273, 128, %s270, %s259
        $region40: #{tpu_custom_call.1} parent=27 // pred_fallthru
          _
      $region28: #{tpu_custom_call.1} parent=5 // pred_fallthru
        _
      %p276 = scmp.le.s32.totalorder 2, %s15
      // Predicated region
      $region41: #{tpu_custom_call.1} parent=5 // pred_check
        %p277 = pneg %p276
      $region42: #{tpu_custom_call.1} parent=5 // pred_check_branch
        %279 = sbr.rel (%p277) target = $region44
      $region43: #{tpu_custom_call.1} parent=5 // pred_region
        %s280 = ssub.s32 %s15, 2
        // Predicated region
        $region45: #{tpu_custom_call.1} parent=43 // pred_check
          %p281 = pneg %p91
        $region46: #{tpu_custom_call.1} parent=43 // pred_check_branch
          %283 = sbr.rel (%p281) target = $region48
        $region47: #{tpu_custom_call.1} parent=43 // pred_region
          %s284 = sand.u32 %s76, 1
          %s285 = scalar_lea.sflag [#allocation4], %s284
          %s286 = sand.u32 %s76, 1
          %s287 = smul.addr %s286, 8
          %s288 = scalar_lea.vmem [#allocation7], %s287
          %289 = dma.done %s285, 128
        $region48: #{tpu_custom_call.1} parent=43 // pred_fallthru
          _
      $region44: #{tpu_custom_call.1} parent=5 // pred_fallthru
        _
    $region6: #{tpu_custom_call.1} parent=1 // loop_footer
      %s19 = sadd.s32 1, %s15
    $region7: #{tpu_custom_call.1} parent=1 // loop_footer_branch
      %14 = sbr.rel target = $region3
    $region8: #{tpu_custom_call.1} parent=1 // loop_exit
      _
    %290 = vsyncpa [#allocation3], 1
    %s291 = scalar_lea.sflag [#allocation3], 1
    %292 = vsyncpa %s291, 1
    %293 = vsyncpa [#allocation6], 1
    %294 = vsyncpa [#allocation4], 1
    %s295 = scalar_lea.sflag [#allocation4], 1
    %296 = vsyncpa %s295, 1

</llo_original>
